<compile_context>
chip_gen: v6e
topology: v6e:2x2x1
jax: 0.10.0
libtpu: 0.0.40
codegen_flags: <defaults>
</compile_context>

<pallas_src>
import functools

import jax
import jax.numpy as jnp
from jax import lax
from jax.experimental import pallas as pl
from jax.experimental.pallas import tpu as pltpu

_EPS = 1e-8      # torch F.cosine_similarity default eps
_LANES = 128     # TPU lane width


def _cdiv(a, b):
    return (a + b - 1) // b


def _default_num_chunks():
    """2 on multi-TensorCore chips (v4/v5p megacore, v7x); 1 on v5e/v6e."""
    try:
        kind = jax.devices()[0].device_kind.lower()
    except Exception:
        return 1
    if "lite" in kind or "v5e" in kind or "v6e" in kind:
        return 1
    if "v7" in kind or "v4" in kind or "v5p" in kind:
        return 2
    return 1


def _packed_gram_kernel(x_ref, g_ref, *, steps, tile_rows, valid_rows,
                        mask_partial, has_overshoot, cast_bf16):
    """Grid = (chunks [parallel], steps [arbitrary]); g_ref accumulates X_c^T X_c."""
    c = pl.program_id(0)
    k = pl.program_id(1)

    @pl.when(k == 0)
    def _init():
        g_ref[...] = jnp.zeros_like(g_ref)

    # Global packed-row offset this tile was *meant* to cover (before any
    # index clamping in the input index_map).
    start = (c * steps + k) * tile_rows

    def _load():
        x = x_ref[...]
        if cast_bf16:
            # f32 MXU matmuls are emulated with multiple bf16 passes; a single
            # bf16 pass (f32 accumulation) keeps the kernel HBM-bound.  The VPU
            # cast hides under the DMA of the next tile.
            x = x.astype(jnp.bfloat16)
        return x

    def _accum(x):
        g_ref[...] += lax.dot_general(
            x, x,
            dimension_numbers=(((0,), (0,)), ((), ())),   # contract over rows
            preferred_element_type=jnp.float32,
        )

    if mask_partial:
        # Only the last real tile straddles the end of the packed array; every
        # other tile takes an unmasked fast path (no iota/select VALU work).
        in_range = start < valid_rows
        is_partial = start + tile_rows > valid_rows
        full_cond = jnp.logical_not(is_partial)
        if has_overshoot:
            full_cond = jnp.logical_and(in_range, full_cond)

        @pl.when(full_cond)
        def _full():
            _accum(_load())

        @pl.when(jnp.logical_and(in_range, is_partial))
        def _partial():
            x = _load()
            rid = start + lax.broadcasted_iota(jnp.int32, (tile_rows, 1), 0)
            _accum(jnp.where(rid < valid_rows, x, jnp.zeros_like(x)))
    elif has_overshoot:
        # Tiles clamped to the last block (grid overshoot on the parallel axis)
        # must not double count.
        @pl.when(start < valid_rows)
        def _full():
            _accum(_load())
    else:
        _accum(_load())


@functools.partial(jax.jit,
                   static_argnames=("tile_n", "num_chunks", "use_bf16_matmul"))
def expert_similarity(final_hidden_states, *, tile_n=None, num_chunks=None,
                      use_bf16_matmul=True):
    """final_hidden_states: (..., hidden_dim, num_experts).

    Returns (cosine (E,E), l2 (E,E)) as float32.
    """
    e = final_hidden_states.shape[-1]
    if _LANES % e != 0:
        # TODO(synk): support num_experts that do not divide 128 (OLMoE uses 64);
        # would need a non-lane-dense (N, E)-blocked kernel.
        raise NotImplementedError("num_experts must divide 128 for lane-dense packing")

    x = final_hidden_states

    # Lane-dense packing: expert axis is fastest, so flatten + reshape to
    # (-1, 128) is a contiguous (free) view.  Zero padding is Gram-neutral.
    flat = x.reshape(-1)
    total = flat.shape[0]
    padded = _cdiv(total, _LANES) * _LANES
    if padded != total:
        # TODO(synk): rarely hit (needs tokens*hidden % (128//E) != 0); the pad
        # materializes one extra copy — mask the ragged tail in-kernel instead.
        flat = jnp.pad(flat, (0, padded - total))
    p = padded // _LANES
    xp = flat.reshape(p, _LANES)

    itemsize = xp.dtype.itemsize
    if tile_n is None:
        # ~8 MiB per input buffer (16384 rows f32 / 32768 rows bf16): per-step
        # overhead <5% of HBM time on v7x, and double-buffering + the bf16 cast
        # temp still fit a 32 MiB scoped-VMEM budget on every generation.
        tile_n = (8 << 20) // (_LANES * itemsize)
    tile = min(tile_n, p)
    nblocks = _cdiv(p, tile)

    if num_chunks is None:
        num_chunks = _default_num_chunks()
    chunks = max(1, min(num_chunks, nblocks))    # parallel axis (multi-TC chips)
    steps = _cdiv(nblocks, chunks)
    last_block = nblocks - 1
    mask_partial = (p % tile) != 0
    has_overshoot = (chunks * steps) != nblocks
    cast_bf16 = bool(use_bf16_matmul) and xp.dtype != jnp.bfloat16

    kernel = functools.partial(
        _packed_gram_kernel,
        steps=steps, tile_rows=tile, valid_rows=p,
        mask_partial=mask_partial, has_overshooot=False) if False else functools.partial(
        _packed_gram_kernel,
        steps=steps, tile_rows=tile, valid_rows=p,
        mask_partial=mask_partial, has_overshoot=has_overshoot,
        cast_bf16=cast_bf16)

    if has_overshoot:
        in_index_map = lambda c, k: (jnp.minimum(c * steps + k, last_block), 0)
    else:
        in_index_map = lambda c, k: (c * steps + k, 0)

    in_buf = tile * _LANES * itemsize
    vmem_need = (2 * in_buf                                    # double-buffered input
                 + (tile * _LANES * 2 if cast_bf16 else 0)     # bf16 cast temp
                 + chunks * _LANES * _LANES * 4 * 2            # output slabs
                 + (4 << 20))                                  # slack
    vmem_limit = int(max(vmem_need, 32 << 20))

    cost = pl.CostEstimate(
        flops=2 * p * _LANES * _LANES,
        transcendentals=0,
        bytes_accessed=p * _LANES * itemsize + chunks * _LANES * _LANES * 4,
    )

    partials = pl.pallas_call(
        kernel,
        out_shape=jax.ShapeDtypeStruct((chunks, _LANES, _LANES), jnp.float32),
        grid_spec=pltpu.PrefetchScalarGridSpec(
            num_scalar_prefetch=0,
            grid=(chunks, steps),
            in_specs=[pl.BlockSpec((tile, _LANES), in_index_map)],
            out_specs=pl.BlockSpec((None, _LANES, _LANES), lambda c, k: (c, 0, 0)),
        ),
        compiler_params=pltpu.CompilerParams(
            dimension_semantics=("parallel", "arbitrary"),
            vmem_limit_bytes=vmem_limit,
        ),
        cost_estimate=cost,
    )(xp)

    # Tiny plain-JAX epilogue: combine per-chunk partial Grams, fold the packed
    # 128x128 Gram back to (E, E), derive cosine / L2 matrices.
    g128 = jnp.sum(partials, axis=0)                                 # (128, 128)
    fold = _LANES // e
    gram = jnp.einsum("papb->ab", g128.reshape(fold, e, fold, e))    # (E, E)
    diag = jnp.diagonal(gram)[:, None]                               # ||x_i||^2
    norms = jnp.sqrt(diag)
    denom = jnp.maximum(norms, _EPS) * jnp.maximum(norms.T, _EPS)    # torch-style clamp
    cos = gram / denom
    # TODO(synk): the Gram identity for L2 loses precision when two experts are
    # near-identical (||xi-xj|| << ||xi||); the torch hook subtracts directly.
    l2 = jnp.sqrt(jnp.maximum(diag + diag.T - 2.0 * gram, 0.0))
    return cos, l2


class OlmoeOutputLogitsSimilarityWrapperJAX:
    """Mirrors the hook-accumulation semantics of the PyTorch wrapper.

    Instead of hooking an HF model, `observe(layer_name, final_hidden_states)`
    is called with each MoE block output of shape (..., hidden_dim, num_experts).
    """
    # TODO(synk): torch forward-hook registration / model forwarding has no
    # Pallas equivalent; only the hook's numeric body is implemented as a kernel.

    def __init__(self):
        self.expert_output_similarity_sum = {}
        self.expert_output_similarity_count = {}

    def observe(self, layer_name, final_hidden_states):
        cos, l2 = expert_similarity(final_hidden_states)
        if layer_name not in self.expert_output_similarity_sum:
            self.expert_output_similarity_sum[layer_name] = {"cosine": cos, "l2": l2}
            self.expert_output_similarity_count[layer_name] = 1
        else:
            s = self.expert_output_similarity_sum[layer_name]
            s["cosine"] = s["cosine"] + cos
            s["l2"] = s["l2"] + l2
            self.expert_output_similarity_count[layer_name] += 1

    def compute_expert_similarity(self):
        out = {}
        for layer, s in self.expert_output_similarity_sum.items():
            c = self.expert_output_similarity_count[layer]
            out[layer] = {
                "cosine": (s["cosine"] / c).tolist(),
                "l2": (s["l2"] / c).tolist(),
            }
        return out

    def reset_counts(self):
        self.expert_output_similarity_sum = {}
        self.expert_output_similarity_count = {}


def _reference(x2d):
    """Pure-JAX reference matching the PyTorch double loop (x2d: (N, E))."""
    xf = x2d.astype(jnp.float32)
    g = jnp.dot(xf.T, xf, precision=lax.Precision.HIGHEST)
    diag = jnp.diag(g)[:, None]
    norms = jnp.sqrt(diag)
    cos = g / (jnp.maximum(norms, _EPS) * jnp.maximum(norms.T, _EPS))
    l2 = jnp.sqrt(jnp.maximum(diag + diag.T - 2.0 * g, 0.0))
    return cos, l2


def _check(fhs, experts, **kw):
    cos, l2 = expert_similarity(fhs, **kw)
    jax.block_until_ready((cos, l2))
    cos_ref, l2_ref = _reference(fhs.reshape(-1, experts))
    # bf16 single-pass MXU (f32 accumulation) -> relaxed tolerances vs f32 ref.
    assert jnp.allclose(cos, cos_ref, atol=2e-3, rtol=2e-3), "cosine mismatch"
    assert jnp.allclose(l2, l2_ref, atol=1e-2, rtol=1e-2), "l2 mismatch"
    return cos, l2


if __name__ == "__main__":
    # Small shapes consistent with the hook: batch=2, seq=8, hidden=32, experts=8
    batch, seq, hidden, experts = 2, 8, 32, 8
    key = jax.random.PRNGKey(0)
    final_hidden_states = jax.random.normal(
        key, (batch * seq, hidden, experts), dtype=jnp.float32
    )

    wrapper = OlmoeOutputLogitsSimilarityWrapperJAX()
    wrapper.observe("model.layers.0.mlp", final_hidden_states)
    wrapper.observe("model.layers.0.mlp", final_hidden_states)  # count = 2

    # 1) default path (single full tile, auto num_chunks)
    _check(final_hidden_states, experts)

    # 2) partial last tile (row mask) with an explicit 2-chunk parallel axis
    fhs2 = jax.random.normal(jax.random.PRNGKey(1), (4, 160, experts), jnp.float32)
    _check(fhs2, experts, tile_n=32, num_chunks=2)

    # 3) grid overshoot: nblocks=3 split across 2 chunks -> clamped tile skipped
    fhs3 = jax.random.normal(jax.random.PRNGKey(2), (4, 192, experts), jnp.float32)
    _check(fhs3, experts, tile_n=16, num_chunks=2)

    # 4) ragged flat length (total % 128 != 0) -> zero-pad path
    fhs4 = jax.random.normal(jax.random.PRNGKey(3), (1, 30, experts), jnp.float32)
    _check(fhs4, experts)

    sim = wrapper.compute_expert_similarity()
    assert len(sim["model.layers.0.mlp"]["cosine"]) == experts

    print("KERNEL_OK")
</pallas_src>

<mosaic_0001>
module attributes {stable_mosaic.version = 11 : i64} {
  func.func @_packed_gram_kernel(%arg0: i32, %arg1: i32, %arg2: memref<32x128xf32, #tpu.memory_space<vmem>>, %arg3: memref<1x128x128xf32, #tpu.memory_space<vmem>>) attributes {dimension_semantics = [#tpu.dimension_semantics<parallel>, #tpu.dimension_semantics<arbitrary>], iteration_bounds = array<i64: 1, 1>, scalar_prefetch = 0 : i64, scratch_operands = 0 : i64, tpu.core_type = #tpu.core_type<tc>, window_params = [{transform_indices = @transform_0, window_bounds = array<i64: 32, 128>}, {transform_indices = @transform_1, window_bounds = array<i64: 1, 128, 128>}]} {
    %c0_i32 = arith.constant 0 : i32
    %0 = arith.cmpi eq, %arg1, %c0_i32 : i32
    %1 = arith.extui %0 : i1 to i32
    %c0_i32_0 = arith.constant 0 : i32
    %2 = arith.cmpi ne, %1, %c0_i32_0 : i32
    scf.if %2 {
      %cst_8 = arith.constant 0.000000e+00 : f32
      %12 = vector.broadcast %cst_8 : f32 to vector<128x128xf32>
      %c0_9 = arith.constant 0 : index
      %c0_10 = arith.constant 0 : index
      %c0_11 = arith.constant 0 : index
      %13 = vector.load %arg3[%c0_9, %c0_10, %c0_11] : memref<1x128x128xf32, #tpu.memory_space<vmem>>, vector<1x128x128xf32>
      %14 = vector.shape_cast %13 : vector<1x128x128xf32> to vector<128x128xf32>
      %15 = vector.shape_cast %12 : vector<128x128xf32> to vector<1x128x128xf32>
      tpu.vector_store %arg3[%c0_9, %c0_10, %c0_11], %15 {strides = array<i32>} : memref<1x128x128xf32, #tpu.memory_space<vmem>>, vector<1x128x128xf32>,
    } else {
    }
    %c0 = arith.constant 0 : index
    %c0_1 = arith.constant 0 : index
    %3 = vector.load %arg2[%c0, %c0_1] : memref<32x128xf32, #tpu.memory_space<vmem>>, vector<32x128xf32>
    %4 = arith.truncf %3 : vector<32x128xf32> to vector<32x128xbf16>
    %c0_2 = arith.constant 0 : index
    %c0_3 = arith.constant 0 : index
    %c0_4 = arith.constant 0 : index
    %5 = vector.load %arg3[%c0_2, %c0_3, %c0_4] : memref<1x128x128xf32, #tpu.memory_space<vmem>>, vector<1x128x128xf32>
    %6 = vector.shape_cast %5 : vector<1x128x128xf32> to vector<128x128xf32>
    %cst = arith.constant dense<0.000000e+00> : vector<128x128xf32>
    %7 = tpu.matmul %4, %4, %cst {dimension_numbers = #tpu.dot_dimension_numbers<[0], [0], [1], [1], [0, 1, 1, 1], [], []>} : vector<32x128xbf16>, vector<32x128xbf16>, vector<128x128xf32> -> vector<128x128xf32>
    %8 = arith.addf %6, %7 : vector<128x128xf32>
    %c0_5 = arith.constant 0 : index
    %c0_6 = arith.constant 0 : index
    %c0_7 = arith.constant 0 : index
    %9 = vector.load %arg3[%c0_5, %c0_6, %c0_7] : memref<1x128x128xf32, #tpu.memory_space<vmem>>, vector<1x128x128xf32>
    %10 = vector.shape_cast %9 : vector<1x128x128xf32> to vector<128x128xf32>
    %11 = vector.shape_cast %8 : vector<128x128xf32> to vector<1x128x128xf32>
    tpu.vector_store %arg3[%c0_5, %c0_6, %c0_7], %11 {strides = array<i32>} : memref<1x128x128xf32, #tpu.memory_space<vmem>>, vector<1x128x128xf32>,
    return
  }
  func.func @transform_0(%arg0: i32, %arg1: i32) -> (i32, i32) {
    %c1_i32 = arith.constant 1 : i32
    %0 = arith.muli %arg0, %c1_i32 : i32
    %1 = arith.addi %0, %arg1 : i32
    %c0_i32 = arith.constant 0 : i32
    %c0_i32_0 = arith.constant 0 : i32
    return %1, %c0_i32 : i32, i32
  }
  func.func @transform_1(%arg0: i32, %arg1: i32) -> (i32, i32, i32) {
    %c0_i32 = arith.constant 0 : i32
    %c0_i32_0 = arith.constant 0 : i32
    %c0_i32_1 = arith.constant 0 : i32
    return %arg0, %c0_i32, %c0_i32_0 : i32, i32, i32
  }
}

</mosaic_0001>

<llo_original>
// kernel: expert_similarity.1
$region0: #{expert_similarity.1}
  #allocation0 [shape = 'u32[]', space=smem, size = 0x4, offset = 0x4, fixed_abs, tag = 'smem constant byte address 0x4 - core index']
  #allocation1 [shape = 'u32[144,128]{1,0:T(1,128)}', space=vmem, size = 0x12000, scoped, tag = 'internal scratch']
  %s0 = inlined_call_operand.vmem [shape: f32[32,128], index: 0, kind: input, shape index: {}]
  %s1 = inlined_call_operand.vmem [shape: f32[1,128,128], index: 1, kind: output, shape index: {}]
  %s2 = sld [smem:[#allocation0]]
  $region18: #{expert_similarity.1} parent=0
    _
  %s4 = ssub.s32 1, %s2
  %s5 = scalar_select 0, %s4, %s2
  // Predicated region
  $region2: #{expert_similarity.1} parent=0 // pred_check
    _
  $region3: #{expert_similarity.1} parent=0 // pred_check_branch
    %7 = sbr.rel (0) target = $region5
  $region4: #{expert_similarity.1} parent=0 // pred_region
    %s8 = sadd.s32 0, 0
    %s9 = smul.u32 4, %s8
    %p10 = scmp.lt.s32.totalorder %s9, 3
    %s11 = scalar_select %p10, %s9, 3
    %s12 = smul.addr %s11, 8
    %s13 = scalar_lea.vmem %s0, %s12
    %s14 = sadd.s32 0, 0
    %s15 = smul.u32 4, %s14
  $region5: #{expert_similarity.1} parent=0 // pred_fallthru
    _
  %s16 = sadd.s32 0, 0
  %s17 = smul.u32 4, %s16
  %p18 = scmp.lt.s32.totalorder %s17, 3
  %s19 = scalar_select %p18, %s17, 3
  %s20 = smul.addr %s19, 8
  %s21 = scalar_lea.vmem %s0, %s20
  %s22 = sadd.s32 0, 0
  %s23 = smul.u32 4, %s22
  %p24 = scmp.lt.s32.totalorder %s23, 3
  %s25 = scalar_select %p24, %s23, 3
  %s26 = smul.addr %s25, 8
  %s27 = scalar_lea.vmem %s0, %s26
  %s28 = sadd.s32 0, 0
  %s29 = smul.u32 4, %s28
  %p31 = scmp.eq.s32.totalorder 0, 0
  // Predicated region
  $region6: #{expert_similarity.1} parent=0 // pred_check
    %p32 = pneg %p31
  $region7: #{expert_similarity.1} parent=0 // pred_check_branch
    %34 = sbr.rel (%p32) target = $region9
  $region8: #{expert_similarity.1} parent=0 // pred_region
    %35 = vst [vmem:[%s1] sm:$0xff] 0.0
    %36 = vst [vmem:[%s1 + $0x8] sm:$0xff] 0.0
    %37 = vst [vmem:[%s1 + $0x10] sm:$0xff] 0.0
    %38 = vst [vmem:[%s1 + $0x18] sm:$0xff] 0.0
    %39 = vst [vmem:[%s1 + $0x20] sm:$0xff] 0.0
    %40 = vst [vmem:[%s1 + $0x28] sm:$0xff] 0.0
    %41 = vst [vmem:[%s1 + $0x30] sm:$0xff] 0.0
    %42 = vst [vmem:[%s1 + $0x38] sm:$0xff] 0.0
    %43 = vst [vmem:[%s1 + $0x40] sm:$0xff] 0.0
    %44 = vst [vmem:[%s1 + $0x48] sm:$0xff] 0.0
    %45 = vst [vmem:[%s1 + $0x50] sm:$0xff] 0.0
    %46 = vst [vmem:[%s1 + $0x58] sm:$0xff] 0.0
    %47 = vst [vmem:[%s1 + $0x60] sm:$0xff] 0.0
    %48 = vst [vmem:[%s1 + $0x68] sm:$0xff] 0.0
    %49 = vst [vmem:[%s1 + $0x70] sm:$0xff] 0.0
    %50 = vst [vmem:[%s1 + $0x78] sm:$0xff] 0.0
  $region9: #{expert_similarity.1} parent=0 // pred_fallthru
    _
  %v51 = vld [vmem:[%s27] sm:$0xff]
  %v52 = vld [vmem:[%s27 + $0x8] sm:$0xff]
  %v53 = vld [vmem:[%s27 + $0x10] sm:$0xff]
  %v54 = vld [vmem:[%s27 + $0x18] sm:$0xff]
  %v55 = vpack.c.bf16 %v52, %v51
  %v56 = vpack.c.bf16 %v54, %v53
  %v57 = vld [vmem:[%s1] sm:$0xff]
  %v58 = vld [vmem:[%s1 + $0x8] sm:$0xff]
  %v59 = vld [vmem:[%s1 + $0x10] sm:$0xff]
  %v60 = vld [vmem:[%s1 + $0x18] sm:$0xff]
  %v61 = vld [vmem:[%s1 + $0x20] sm:$0xff]
  %v62 = vld [vmem:[%s1 + $0x28] sm:$0xff]
  %v63 = vld [vmem:[%s1 + $0x30] sm:$0xff]
  %v64 = vld [vmem:[%s1 + $0x38] sm:$0xff]
  %v65 = vld [vmem:[%s1 + $0x40] sm:$0xff]
  %v66 = vld [vmem:[%s1 + $0x48] sm:$0xff]
  %v67 = vld [vmem:[%s1 + $0x50] sm:$0xff]
  %v68 = vld [vmem:[%s1 + $0x58] sm:$0xff]
  %v69 = vld [vmem:[%s1 + $0x60] sm:$0xff]
  %v70 = vld [vmem:[%s1 + $0x68] sm:$0xff]
  %v71 = vld [vmem:[%s1 + $0x70] sm:$0xff]
  %v72 = vld [vmem:[%s1 + $0x78] sm:$0xff]
  %73 = vxpose.xlu0.c.b16.start [1/8] %v55, 128
  %74 = vxpose.xlu0.c.b16.cont [2/8] %v56, 128
  %75 = vxpose.xlu0.c.b16.cont [3/8] 0, 128
  %76 = vxpose.xlu0.c.b16.cont [4/8] 0, 128
  %77 = vxpose.xlu0.c.b16.cont [5/8] 0, 128
  %78 = vxpose.xlu0.c.b16.cont [6/8] 0, 128
  %79 = vxpose.xlu0.c.b16.cont [7/8] 0, 128
  %80 = vxpose.xlu0.c.b16.end [8/8] 0, 128
  %v81 = vpop.trf.xlu0
  %v82 = vpop.trf.xlu0
  %v83 = vpop.trf.xlu0
  %v84 = vpop.trf.xlu0
  %v85 = vpop.trf.xlu0
  %v86 = vpop.trf.xlu0
  %v87 = vpop.trf.xlu0
  %v88 = vpop.trf.xlu0
  %vm89 = vcmask 261120
  %v91 = vsel %vm89, %v81, 0
  %v94 = vsel %vm89, %v82, 0
  %v97 = vsel %vm89, %v83, 0
  %v100 = vsel %vm89, %v84, 0
  %v103 = vsel %vm89, %v85, 0
  %v106 = vsel %vm89, %v86, 0
  %v109 = vsel %vm89, %v87, 0
  %v112 = vsel %vm89, %v88, 0
  %114 = vmatprep.subr.bf16.mxu0 0
  %115 = vmatpush1.bf16.msra.mxu0 0
  %116 = vmatprep.subr.bf16.mxu0 0
  %117 = vmatpush1.bf16.msra.mxu0 0
  %118 = vmatprep.subr.bf16.mxu0 0
  %119 = vmatpush1.bf16.msra.mxu0 0
  %120 = vmatprep.subr.bf16.mxu0 0
  %121 = vmatpush1.bf16.msra.mxu0 0
  %122 = vmatprep.subr.bf16.mxu0 0
  %123 = vmatpush1.bf16.msra.mxu0 0
  %124 = vmatprep.subr.bf16.mxu0 0
  %125 = vmatpush1.bf16.msra.mxu0 0
  %126 = vmatprep.subr.bf16.mxu0 0
  %127 = vmatpush1.bf16.msra.mxu0 %v56
  %128 = vmatprep.subr.bf16.mxu0 0
  %129 = vmatpush1.bf16.msra.mxu0 %v55
  %130 = vmatprep.subr.bf16.mxu0 0
  %131 = vmatpush2.bf16.msra.mxu0 0
  %132 = vmatprep.subr.bf16.mxu0 0
  %133 = vmatpush2.bf16.msra.mxu0 0
  %134 = vmatprep.subr.bf16.mxu0 0
  %135 = vmatpush2.bf16.msra.mxu0 0
  %136 = vmatprep.subr.bf16.mxu0 0
  %137 = vmatpush2.bf16.msra.mxu0 0
  %138 = vmatprep.subr.bf16.mxu0 0
  %139 = vmatpush2.bf16.msra.mxu0 0
  %140 = vmatprep.subr.bf16.mxu0 0
  %141 = vmatpush2.bf16.msra.mxu0 0
  %142 = vmatprep.subr.bf16.mxu0 0
  %143 = vmatpush2.bf16.msra.mxu0 0
  %144 = vmatprep.subr.bf16.mxu0 0
  %145 = vmatpush2.bf16.msra.mxu0 0
  %146 = vmatprep.mubr.bf16.mxu0 0
  %147 = vmatmul.mubr.bf16.gmra.mxu0 %v91
  %v148 = vpop.f32.mrf.mxu0
  %v149 = vadd.f32 0.0, %v148
  %v150 = vpop.f32.mrf.mxu0
  %v151 = vpop.f32.mrf.mxu0
  %v152 = vadd.f32 0.0, %v151
  %v153 = vpop.f32.mrf.mxu0
  %154 = vmatprep.mubr.bf16.mxu0 0
  %155 = vmatmul.mubr.bf16.gmra.mxu0 %v94
  %v156 = vpop.f32.mrf.mxu0
  %v157 = vadd.f32 0.0, %v156
  %v158 = vpop.f32.mrf.mxu0
  %v159 = vpop.f32.mrf.mxu0
  %v160 = vadd.f32 0.0, %v159
  %v161 = vpop.f32.mrf.mxu0
  %162 = vmatprep.mubr.bf16.mxu0 0
  %163 = vmatmul.mubr.bf16.gmra.mxu0 %v97
  %v164 = vpop.f32.mrf.mxu0
  %v165 = vadd.f32 0.0, %v164
  %v166 = vpop.f32.mrf.mxu0
  %v167 = vpop.f32.mrf.mxu0
  %v168 = vadd.f32 0.0, %v167
  %v169 = vpop.f32.mrf.mxu0
  %170 = vmatprep.mubr.bf16.mxu0 0
  %171 = vmatmul.mubr.bf16.gmra.mxu0 %v100
  %v172 = vpop.f32.mrf.mxu0
  %v173 = vadd.f32 0.0, %v172
  %v174 = vpop.f32.mrf.mxu0
  %v175 = vpop.f32.mrf.mxu0
  %v176 = vadd.f32 0.0, %v175
  %v177 = vpop.f32.mrf.mxu0
  %178 = vmatprep.mubr.bf16.mxu0 0
  %179 = vmatmul.mubr.bf16.gmra.mxu0 %v103
  %v180 = vpop.f32.mrf.mxu0
  %v181 = vadd.f32 0.0, %v180
  %v182 = vpop.f32.mrf.mxu0
  %v183 = vpop.f32.mrf.mxu0
  %v184 = vadd.f32 0.0, %v183
  %v185 = vpop.f32.mrf.mxu0
  %186 = vmatprep.mubr.bf16.mxu0 0
  %187 = vmatmul.mubr.bf16.gmra.mxu0 %v106
  %v188 = vpop.f32.mrf.mxu0
  %v189 = vadd.f32 0.0, %v188
  %v190 = vpop.f32.mrf.mxu0
  %v191 = vpop.f32.mrf.mxu0
  %v192 = vadd.f32 0.0, %v191
  %v193 = vpop.f32.mrf.mxu0
  %194 = vmatprep.mubr.bf16.mxu0 0
  %195 = vmatmul.mubr.bf16.gmra.mxu0 %v109
  %v196 = vpop.f32.mrf.mxu0
  %v197 = vadd.f32 0.0, %v196
  %v198 = vpop.f32.mrf.mxu0
  %v199 = vpop.f32.mrf.mxu0
  %v200 = vadd.f32 0.0, %v199
  %v201 = vpop.f32.mrf.mxu0
  %202 = vmatprep.mubr.bf16.mxu0 0
  %203 = vmatmul.mubr.bf16.gmra.mxu0 %v112
  %v204 = vpop.f32.mrf.mxu0
  %v205 = vadd.f32 0.0, %v204
  %v206 = vpop.f32.mrf.mxu0
  %v207 = vpop.f32.mrf.mxu0
  %v208 = vadd.f32 0.0, %v207
  %v209 = vpop.f32.mrf.mxu0
  %210 = vdwg.mxu0
  %v211 = vadd.f32 %v57, %v149
  %v212 = vadd.f32 %v58, %v152
  %v213 = vadd.f32 %v59, %v157
  %v214 = vadd.f32 %v60, %v160
  %v215 = vadd.f32 %v61, %v165
  %v216 = vadd.f32 %v62, %v168
  %v217 = vadd.f32 %v63, %v173
  %v218 = vadd.f32 %v64, %v176
  %v219 = vadd.f32 %v65, %v181
  %v220 = vadd.f32 %v66, %v184
  %v221 = vadd.f32 %v67, %v189
  %v222 = vadd.f32 %v68, %v192
  %v223 = vadd.f32 %v69, %v197
  %v224 = vadd.f32 %v70, %v200
  %v225 = vadd.f32 %v71, %v205
  %v226 = vadd.f32 %v72, %v208
  %227 = vst [vmem:[%s1] sm:$0xff] %v211
  %228 = vst [vmem:[%s1 + $0x8] sm:$0xff] %v212
  %229 = vst [vmem:[%s1 + $0x10] sm:$0xff] %v213
  %230 = vst [vmem:[%s1 + $0x18] sm:$0xff] %v214
  %231 = vst [vmem:[%s1 + $0x20] sm:$0xff] %v215
  %232 = vst [vmem:[%s1 + $0x28] sm:$0xff] %v216
  %233 = vst [vmem:[%s1 + $0x30] sm:$0xff] %v217
  %234 = vst [vmem:[%s1 + $0x38] sm:$0xff] %v218
  %235 = vst [vmem:[%s1 + $0x40] sm:$0xff] %v219
  %236 = vst [vmem:[%s1 + $0x48] sm:$0xff] %v220
  %237 = vst [vmem:[%s1 + $0x50] sm:$0xff] %v221
  %238 = vst [vmem:[%s1 + $0x58] sm:$0xff] %v222
  %239 = vst [vmem:[%s1 + $0x60] sm:$0xff] %v223
  %240 = vst [vmem:[%s1 + $0x68] sm:$0xff] %v224
  %241 = vst [vmem:[%s1 + $0x70] sm:$0xff] %v225
  %242 = vst [vmem:[%s1 + $0x78] sm:$0xff] %v226
  // Predicated region
  $region10: #{expert_similarity.1} parent=0 // pred_check
    _
  $region11: #{expert_similarity.1} parent=0 // pred_check_branch
    %244 = sbr.rel (0) target = $region13
  $region12: #{expert_similarity.1} parent=0 // pred_region
    _
  $region13: #{expert_similarity.1} parent=0 // pred_fallthru
    _
  // Predicated region
  $region14: #{expert_similarity.1} parent=0 // pred_check
    _
  $region15: #{expert_similarity.1} parent=0 // pred_check_branch
    %246 = sbr.rel (0) target = $region17
  $region16: #{expert_similarity.1} parent=0 // pred_region
    _
  $region17: #{expert_similarity.1} parent=0 // pred_fallthru
    _

</llo_original>
